<compile_context>
chip_gen: v6e
topology: v6e:2x2x1
jax: 0.10.0
libtpu: 0.0.40
codegen_flags: <defaults>
</compile_context>

<pallas_src>
import math

import jax
import jax.numpy as jnp
from jax.experimental import pallas as pl
from jax.experimental.pallas import tpu as pltpu


# ---------------------------------------------------------------------------
# Hardware-aware budgets
# ---------------------------------------------------------------------------
def _vmem_config():
    """Per-generation VMEM budgets.

    v5e/v6e have 128 MiB physical VMEM (16/32 MiB scoped defaults); v7x has
    64 MiB.  We raise the scoped limit explicitly so the chosen block sizes
    are never squeezed by the default, and keep the per-block budget small
    enough that pass 2's 4 live double-buffered blocks always fit.
    """
    try:
        phys = int(pltpu.get_tpu_info().vmem_capacity_bytes)
    except Exception:  # not queryable -> assume the most constrained (v7x)
        phys = 64 << 20
    if phys >= (100 << 20):        # v5e / v6e class (128 MiB physical)
        return {"block_budget": 6 << 20, "vmem_limit": 64 << 20,
                "fused_budget": 56 << 20}
    # v7x class (64 MiB physical)
    return {"block_budget": 4 << 20, "vmem_limit": 48 << 20,
            "fused_budget": 40 << 20}


def _choose_tiles(n, c, hw, itemsize, block_budget):
    """Pick (t_n, t_hw, n_hw, masked) so each x block is ~MiB-scale.

    t_hw is a multiple of 128 (or the full HW extent).  If HW exceeds the lane
    budget and no multiple of 128 divides it, fall back to a cdiv grid with a
    masked tail instead of a giant full-row block (VMEM-safe for any HW).
    The N axis is folded into the block until the block reaches the budget.
    """
    budget_lanes = max(128, (block_budget // max(1, c * itemsize)) // 128 * 128)
    if hw <= budget_lanes:
        t_hw, masked = hw, False          # full-extent lane dim, always legal
    else:
        t_hw = 0
        t = budget_lanes
        while t >= 128:
            if hw % t == 0:
                t_hw = t
                break
            t -= 128
        if t_hw == 0:
            t_hw = budget_lanes           # masked tail via cdiv grid
            masked = True
        else:
            masked = False
    n_hw = pl.cdiv(hw, t_hw)
    per_n = max(1, c * t_hw * itemsize)
    t_n = max(1, min(n, block_budget // per_n))
    while n % t_n != 0:                   # keep the N grid exact
        t_n -= 1
    return t_n, t_hw, n_hw, masked


# ---------------------------------------------------------------------------
# Kernels
# ---------------------------------------------------------------------------
def _make_stats_kernel(t_n, c, t_hw, hw_total, masked):
    """Per-N-tile partial sum / sum-of-squares across the HW grid axis."""
    def kernel(x_ref, sum_ref, sumsq_ref):
        j = pl.program_id(1)

        @pl.when(j == 0)
        def _():
            sum_ref[...] = jnp.zeros_like(sum_ref)
            sumsq_ref[...] = jnp.zeros_like(sumsq_ref)

        x = x_ref[...].astype(jnp.float32)                      # (t_n, c, t_hw)
        if masked:  # zero the padded lanes of the HW tail block
            lane = jax.lax.broadcasted_iota(jnp.int32, (t_n, c, t_hw), 2)
            valid = hw_total - j * t_hw
            x = jnp.where(lane < valid, x, 0.0)
        # Lane (XLU) reduce per n slice, then fold the N-tile.
        # TODO(synk): a lane-dense (C,128) accumulator (reshape + VPU adds)
        # would shave a few % when compute is exposed; skipped while DMA-bound.
        s = jnp.sum(jnp.sum(x, axis=-1, keepdims=True), axis=0)        # (c, 1)
        sq = jnp.sum(jnp.sum(x * x, axis=-1, keepdims=True), axis=0)   # (c, 1)
        sum_ref[0] += s
        sumsq_ref[0] += sq
    return kernel


def _normalize_kernel(x_ref, scale_ref, shift_ref, o_ref):
    """y = x * scale + shift  (scale/shift fold mean, var, weight, bias)."""
    x = x_ref[...].astype(jnp.float32)                          # (t_n, C, t_hw)
    y = x * scale_ref[...][None] + shift_ref[...][None]         # (C,1) lane bcast
    o_ref[...] = y.astype(o_ref.dtype)


def _make_fused_kernel(m, eps):
    """Single-pass path: x VMEM-resident, stats + normalize in one kernel."""
    def kernel(x_ref, w_ref, b_ref, o_ref, mean_ref, var_ref):
        x = x_ref[...].astype(jnp.float32)                      # (N, C, HW)
        s = jnp.sum(jnp.sum(x, axis=-1, keepdims=True), axis=0)        # (C, 1)
        sq = jnp.sum(jnp.sum(x * x, axis=-1, keepdims=True), axis=0)   # (C, 1)
        mean = s / m
        var = jnp.maximum(sq / m - mean * mean, 0.0)
        inv = jax.lax.rsqrt(var + eps)
        scale = w_ref[...] * inv                                 # (C, 1)
        shift = b_ref[...] - mean * scale                        # (C, 1)
        o_ref[...] = (x * scale[None] + shift[None]).astype(o_ref.dtype)
        mean_ref[...] = mean
        var_ref[...] = var
    return kernel


# ---------------------------------------------------------------------------
# Wrapper
# ---------------------------------------------------------------------------
def bayes_batch_norm_2d(x_nchw, params, running_mean, running_var,
                        eps=1e-5, momentum=0.1, force_two_pass=False):
    """Forward of _BayesBatchNorm (training mode, frozen eps) on NCHW input."""
    N, C, H, W = x_nchw.shape
    HW = H * W
    M = N * HW
    x3 = x_nchw.reshape(N, C, HW)                 # free reshape, no transpose
    itemsize = jnp.dtype(x3.dtype).itemsize
    cfg = _vmem_config()

    to32 = lambda v: jnp.asarray(v, jnp.float32)
    w = (to32(params["weight_mu"])
         + jnp.exp(to32(params["weight_log_sigma"])) * to32(params["weight_eps"]))
    b = (to32(params["bias_mu"])
         + jnp.exp(to32(params["bias_log_sigma"])) * to32(params["bias_eps"]))

    fused_bytes = 3 * N * C * HW * 4 + (2 << 20)   # x(f32) + y + intermediates
    if (not force_two_pass) and fused_bytes <= cfg["fused_budget"]:
        # ---- fused fast path: x resident in VMEM (2x HBM traffic) ----------
        y3, mean2, var2 = pl.pallas_call(
            _make_fused_kernel(float(M), float(eps)),
            grid=(1,),
            in_specs=[pl.BlockSpec((N, C, HW), lambda i: (0, 0, 0)),
                      pl.BlockSpec((C, 1), lambda i: (0, 0)),
                      pl.BlockSpec((C, 1), lambda i: (0, 0))],
            out_specs=(pl.BlockSpec((N, C, HW), lambda i: (0, 0, 0)),
                       pl.BlockSpec((C, 1), lambda i: (0, 0)),
                       pl.BlockSpec((C, 1), lambda i: (0, 0))),
            out_shape=(jax.ShapeDtypeStruct((N, C, HW), x3.dtype),
                       jax.ShapeDtypeStruct((C, 1), jnp.float32),
                       jax.ShapeDtypeStruct((C, 1), jnp.float32)),
            compiler_params=pltpu.CompilerParams(
                dimension_semantics=("arbitrary",),
                vmem_limit_bytes=cfg["vmem_limit"]),
        )(x3, w.reshape(C, 1), b.reshape(C, 1))
        mean = mean2.reshape(C)
        var = var2.reshape(C)
    else:
        # ---- two-pass streaming path (3x HBM traffic) ----------------------
        t_n, t_hw, n_hw, masked = _choose_tiles(N, C, HW, itemsize,
                                                cfg["block_budget"])
        ng = N // t_n

        # pass 1: per-N-tile partial sums; N axis parallel (megacore on v7x)
        psum, psumsq = pl.pallas_call(
            _make_stats_kernel(t_n, C, t_hw, HW, masked),
            grid=(ng, n_hw),
            in_specs=[pl.BlockSpec((t_n, C, t_hw), lambda n, j: (n, 0, j))],
            out_specs=(pl.BlockSpec((1, C, 1), lambda n, j: (n, 0, 0)),
                       pl.BlockSpec((1, C, 1), lambda n, j: (n, 0, 0))),
            out_shape=(jax.ShapeDtypeStruct((ng, C, 1), jnp.float32),
                       jax.ShapeDtypeStruct((ng, C, 1), jnp.float32)),
            compiler_params=pltpu.CompilerParams(
                dimension_semantics=("parallel", "arbitrary"),
                vmem_limit_bytes=cfg["vmem_limit"]),
        )(x3)

        # tiny (ng, C) fold + per-channel math hoisted to the wrapper
        sum_x = jnp.sum(psum, axis=(0, 2))
        sum_x2 = jnp.sum(psumsq, axis=(0, 2))
        mean = sum_x / M
        # TODO(synk): one-pass E[x^2]-mean^2 can lose precision when
        # |mean| >> std; a shifted / two-pass variance would be more robust.
        var = jnp.maximum(sum_x2 / M - mean * mean, 0.0)

        inv_std = jax.lax.rsqrt(var + eps)
        scale = (w * inv_std).reshape(C, 1)
        shift = (b - mean * w * inv_std).reshape(C, 1)

        # pass 2: elementwise normalize, fully parallel grid
        y3 = pl.pallas_call(
            _normalize_kernel,
            grid=(ng, n_hw),
            in_specs=[pl.BlockSpec((t_n, C, t_hw), lambda n, j: (n, 0, j)),
                      pl.BlockSpec((C, 1), lambda n, j: (0, 0)),
                      pl.BlockSpec((C, 1), lambda n, j: (0, 0))],
            out_specs=pl.BlockSpec((t_n, C, t_hw), lambda n, j: (n, 0, j)),
            out_shape=jax.ShapeDtypeStruct((N, C, HW), x3.dtype),
            compiler_params=pltpu.CompilerParams(
                dimension_semantics=("parallel", "parallel"),
                vmem_limit_bytes=cfg["vmem_limit"]),
        )(x3, scale, shift)

    # ---- running-stat update (PyTorch uses the unbiased variance) ----------
    # TODO(synk): PyTorch raises when N*H*W == 1; here we skip the Bessel
    # correction in that degenerate case instead of erroring.
    unbiased_var = var * (float(M) / float(M - 1)) if M > 1 else var
    new_rm = (1.0 - momentum) * to32(running_mean) + momentum * mean
    new_rv = (1.0 - momentum) * to32(running_var) + momentum * unbiased_var

    return y3.reshape(N, C, H, W), new_rm, new_rv


# ---------------------------------------------------------------------------
# Pure-JAX reference
# ---------------------------------------------------------------------------
def _reference(x_nchw, params, running_mean, running_var, eps, momentum):
    x = x_nchw.astype(jnp.float32)
    w = params["weight_mu"] + jnp.exp(params["weight_log_sigma"]) * params["weight_eps"]
    b = params["bias_mu"] + jnp.exp(params["bias_log_sigma"]) * params["bias_eps"]
    mean = jnp.mean(x, axis=(0, 2, 3))
    var = jnp.var(x, axis=(0, 2, 3))
    n = x.shape[0] * x.shape[2] * x.shape[3]
    unbiased = var * n / (n - 1)
    y = (x - mean[None, :, None, None]) / jnp.sqrt(var + eps)[None, :, None, None]
    y = y * w[None, :, None, None] + b[None, :, None, None]
    new_rm = (1.0 - momentum) * running_mean + momentum * mean
    new_rv = (1.0 - momentum) * running_var + momentum * unbiased
    return y, new_rm, new_rv


if __name__ == "__main__":
    prior_mu, prior_sigma = 0.0, 0.1
    N, C, H, W = 2, 4, 16, 16
    eps, momentum = 1e-5, 0.1

    key = jax.random.PRNGKey(0)
    k_x, k_wmu, k_weps, k_beps = jax.random.split(key, 4)

    # Deterministic parameter init mirroring reset_parameters() + freeze().
    params = {
        "weight_mu": jax.random.uniform(k_wmu, (C,), jnp.float32),        # uniform_()
        "weight_log_sigma": jnp.full((C,), math.log(prior_sigma), jnp.float32),
        "weight_eps": jax.random.normal(k_weps, (C,), jnp.float32),       # randn_like
        "bias_mu": jnp.zeros((C,), jnp.float32),                          # zero_()
        "bias_log_sigma": jnp.full((C,), math.log(prior_sigma), jnp.float32),
        "bias_eps": jax.random.normal(k_beps, (C,), jnp.float32),         # randn_like
    }
    running_mean = jnp.zeros((C,), jnp.float32)
    running_var = jnp.ones((C,), jnp.float32)

    x = jax.random.normal(k_x, (N, C, H, W), jnp.float32)

    y_ref, rm_ref, rv_ref = _reference(x, params, running_mean, running_var,
                                       eps, momentum)

    # Fused (VMEM-resident) fast path — the one dispatched at this small shape.
    y1, rm1, rv1 = bayes_batch_norm_2d(
        x, params, running_mean, running_var, eps=eps, momentum=momentum)
    jax.block_until_ready((y1, rm1, rv1))
    assert jnp.allclose(y1, y_ref, atol=1e-4, rtol=1e-4)
    assert jnp.allclose(rm1, rm_ref, atol=1e-5, rtol=1e-5)
    assert jnp.allclose(rv1, rv_ref, atol=1e-5, rtol=1e-5)

    # Tiled two-pass streaming path (what large tensors use).
    y2, rm2, rv2 = bayes_batch_norm_2d(
        x, params, running_mean, running_var, eps=eps, momentum=momentum,
        force_two_pass=True)
    jax.block_until_ready((y2, rm2, rv2))
    assert jnp.allclose(y2, y_ref, atol=1e-4, rtol=1e-4)
    assert jnp.allclose(rm2, rm_ref, atol=1e-5, rtol=1e-5)
    assert jnp.allclose(rv2, rv_ref, atol=1e-5, rtol=1e-5)

    print("KERNEL_OK")
</pallas_src>

<mosaic_0001>
module attributes {stable_mosaic.version = 11 : i64} {
  func.func @kernel(%arg0: i32, %arg1: memref<2x4x256xf32, #tpu.memory_space<vmem>>, %arg2: memref<4x1xf32, #tpu.memory_space<vmem>>, %arg3: memref<4x1xf32, #tpu.memory_space<vmem>>, %arg4: memref<2x4x256xf32, #tpu.memory_space<vmem>>, %arg5: memref<4x1xf32, #tpu.memory_space<vmem>>, %arg6: memref<4x1xf32, #tpu.memory_space<vmem>>) attributes {dimension_semantics = [#tpu.dimension_semantics<arbitrary>], iteration_bounds = array<i64: 1>, scalar_prefetch = 0 : i64, scratch_operands = 0 : i64, tpu.core_type = #tpu.core_type<tc>, window_params = [{pipeline_mode = #tpu.pipeline_mode<synchronous>, transform_indices = @transform_0, window_bounds = array<i64: 2, 4, 256>}, {pipeline_mode = #tpu.pipeline_mode<synchronous>, transform_indices = @transform_1, window_bounds = array<i64: 4, 1>}, {pipeline_mode = #tpu.pipeline_mode<synchronous>, transform_indices = @transform_2, window_bounds = array<i64: 4, 1>}, {pipeline_mode = #tpu.pipeline_mode<synchronous>, transform_indices = @transform_3, window_bounds = array<i64: 2, 4, 256>}, {pipeline_mode = #tpu.pipeline_mode<synchronous>, transform_indices = @transform_4, window_bounds = array<i64: 4, 1>}, {pipeline_mode = #tpu.pipeline_mode<synchronous>, transform_indices = @transform_5, window_bounds = array<i64: 4, 1>}]} {
    %c0 = arith.constant 0 : index
    %c0_0 = arith.constant 0 : index
    %c0_1 = arith.constant 0 : index
    %0 = vector.load %arg1[%c0, %c0_0, %c0_1] : memref<2x4x256xf32, #tpu.memory_space<vmem>>, vector<2x4x256xf32>
    %cst = arith.constant dense<0.000000e+00> : vector<2x4xf32>
    %1 = vector.multi_reduction <add>, %0, %cst [2] : vector<2x4x256xf32> to vector<2x4xf32>
    %2 = vector.shape_cast %1 : vector<2x4xf32> to vector<2x4x1xf32>
    %cst_2 = arith.constant dense<0.000000e+00> : vector<4x1xf32>
    %3 = vector.multi_reduction <add>, %2, %cst_2 [0] : vector<2x4x1xf32> to vector<4x1xf32>
    %4 = arith.mulf %0, %0 : vector<2x4x256xf32>
    %cst_3 = arith.constant dense<0.000000e+00> : vector<2x4xf32>
    %5 = vector.multi_reduction <add>, %4, %cst_3 [2] : vector<2x4x256xf32> to vector<2x4xf32>
    %6 = vector.shape_cast %5 : vector<2x4xf32> to vector<2x4x1xf32>
    %cst_4 = arith.constant dense<0.000000e+00> : vector<4x1xf32>
    %7 = vector.multi_reduction <add>, %6, %cst_4 [0] : vector<2x4x1xf32> to vector<4x1xf32>
    %cst_5 = arith.constant 5.120000e+02 : f32
    %8 = vector.broadcast %cst_5 : f32 to vector<4x1xf32>
    %9 = arith.divf %3, %8 : vector<4x1xf32>
    %cst_6 = arith.constant 5.120000e+02 : f32
    %10 = vector.broadcast %cst_6 : f32 to vector<4x1xf32>
    %11 = arith.divf %7, %10 : vector<4x1xf32>
    %12 = arith.mulf %9, %9 : vector<4x1xf32>
    %13 = arith.subf %11, %12 : vector<4x1xf32>
    %cst_7 = arith.constant 0.000000e+00 : f32
    %14 = vector.broadcast %cst_7 : f32 to vector<4x1xf32>
    %15 = arith.maximumf %13, %14 : vector<4x1xf32>
    %cst_8 = arith.constant 9.99999974E-6 : f32
    %16 = vector.broadcast %cst_8 : f32 to vector<4x1xf32>
    %17 = arith.addf %15, %16 : vector<4x1xf32>
    %18 = math.rsqrt %17 : vector<4x1xf32>
    %c0_9 = arith.constant 0 : index
    %c0_10 = arith.constant 0 : index
    %19 = vector.load %arg2[%c0_9, %c0_10] : memref<4x1xf32, #tpu.memory_space<vmem>>, vector<4x1xf32>
    %20 = arith.mulf %19, %18 : vector<4x1xf32>
    %c0_11 = arith.constant 0 : index
    %c0_12 = arith.constant 0 : index
    %21 = vector.load %arg3[%c0_11, %c0_12] : memref<4x1xf32, #tpu.memory_space<vmem>>, vector<4x1xf32>
    %22 = arith.mulf %9, %20 : vector<4x1xf32>
    %23 = arith.subf %21, %22 : vector<4x1xf32>
    %24 = vector.shape_cast %20 : vector<4x1xf32> to vector<1x4x1xf32>
    %25 = vector.broadcast %24 : vector<1x4x1xf32> to vector<2x4x256xf32>
    %26 = arith.mulf %0, %25 : vector<2x4x256xf32>
    %27 = vector.shape_cast %23 : vector<4x1xf32> to vector<1x4x1xf32>
    %28 = vector.broadcast %27 : vector<1x4x1xf32> to vector<2x4x256xf32>
    %29 = arith.addf %26, %28 : vector<2x4x256xf32>
    %c0_13 = arith.constant 0 : index
    %c0_14 = arith.constant 0 : index
    %c0_15 = arith.constant 0 : index
    %30 = vector.load %arg4[%c0_13, %c0_14, %c0_15] : memref<2x4x256xf32, #tpu.memory_space<vmem>>, vector<2x4x256xf32>
    tpu.vector_store %arg4[%c0_13, %c0_14, %c0_15], %29 {strides = array<i32>} : memref<2x4x256xf32, #tpu.memory_space<vmem>>, vector<2x4x256xf32>,
    %c0_16 = arith.constant 0 : index
    %c0_17 = arith.constant 0 : index
    %31 = vector.load %arg5[%c0_16, %c0_17] : memref<4x1xf32, #tpu.memory_space<vmem>>, vector<4x1xf32>
    tpu.vector_store %arg5[%c0_16, %c0_17], %9 {strides = array<i32>} : memref<4x1xf32, #tpu.memory_space<vmem>>, vector<4x1xf32>,
    %c0_18 = arith.constant 0 : index
    %c0_19 = arith.constant 0 : index
    %32 = vector.load %arg6[%c0_18, %c0_19] : memref<4x1xf32, #tpu.memory_space<vmem>>, vector<4x1xf32>
    tpu.vector_store %arg6[%c0_18, %c0_19], %15 {strides = array<i32>} : memref<4x1xf32, #tpu.memory_space<vmem>>, vector<4x1xf32>,
    return
  }
  func.func @transform_0(%arg0: i32) -> (i32, i32, i32) {
    %c0_i32 = arith.constant 0 : i32
    %c0_i32_0 = arith.constant 0 : i32
    %c0_i32_1 = arith.constant 0 : i32
    %c0_i32_2 = arith.constant 0 : i32
    return %c0_i32, %c0_i32_0, %c0_i32_1 : i32, i32, i32
  }
  func.func @transform_1(%arg0: i32) -> (i32, i32) {
    %c0_i32 = arith.constant 0 : i32
    %c0_i32_0 = arith.constant 0 : i32
    %c0_i32_1 = arith.constant 0 : i32
    return %c0_i32, %c0_i32_0 : i32, i32
  }
  func.func @transform_2(%arg0: i32) -> (i32, i32) {
    %c0_i32 = arith.constant 0 : i32
    %c0_i32_0 = arith.constant 0 : i32
    %c0_i32_1 = arith.constant 0 : i32
    return %c0_i32, %c0_i32_0 : i32, i32
  }
  func.func @transform_3(%arg0: i32) -> (i32, i32, i32) {
    %c0_i32 = arith.constant 0 : i32
    %c0_i32_0 = arith.constant 0 : i32
    %c0_i32_1 = arith.constant 0 : i32
    %c0_i32_2 = arith.constant 0 : i32
    return %c0_i32, %c0_i32_0, %c0_i32_1 : i32, i32, i32
  }
  func.func @transform_4(%arg0: i32) -> (i32, i32) {
    %c0_i32 = arith.constant 0 : i32
    %c0_i32_0 = arith.constant 0 : i32
    %c0_i32_1 = arith.constant 0 : i32
    return %c0_i32, %c0_i32_0 : i32, i32
  }
  func.func @transform_5(%arg0: i32) -> (i32, i32) {
    %c0_i32 = arith.constant 0 : i32
    %c0_i32_0 = arith.constant 0 : i32
    %c0_i32_1 = arith.constant 0 : i32
    return %c0_i32, %c0_i32_0 : i32, i32
  }
}

</mosaic_0001>

<llo_original>
// kernel: tpu_custom_call.1
$region0: #{tpu_custom_call.1}
  #allocation0 [shape = 'u32[]', space=smem, size = 0x4, offset = 0x4, fixed_abs, tag = 'smem constant byte address 0x4 - core index']
  #allocation1 [shape = 'u32[144,128]{1,0:T(1,128)}', space=vmem, size = 0x12000, scoped, tag = 'internal scratch']
  %s0 = inlined_call_operand.hbm [shape: f32[2,4,256], index: 0, kind: input, shape index: {}]
  %s1 = inlined_call_operand.vmem [shape: f32[4,1], index: 1, kind: input, shape index: {}]
  %s2 = inlined_call_operand.vmem [shape: f32[4,1], index: 2, kind: input, shape index: {}]
  %s3 = inlined_call_operand.hbm [shape: f32[2,4,256], index: 3, kind: output, shape index: {0}]
  %s4 = inlined_call_operand.vmem [shape: f32[4,1], index: 4, kind: output, shape index: {1}]
  %s5 = inlined_call_operand.vmem [shape: f32[4,1], index: 5, kind: output, shape index: {2}]
  %6 = xla_tuple %s3, %s4, %s5
  %s7 = sld [smem:[#allocation0]]
  $region42: #{tpu_custom_call.1} parent=0
    _
  %s9 = ssub.s32 1, %s7
  %s10 = scalar_select 0, %s9, %s7
  $region1: #{tpu_custom_call.1} parent=0
    #allocation2 [shape = 'u8[8192]{0}', space=vmem, size = 0x2000, scoped, tag = 'input window, operand 0, single buffered']
    #allocation3 [shape = 's32[1]{0}', space=sflag, size = 0x4, scoped, tag = 'scoped memory for tpu_custom_call.1']
    #allocation4 [shape = 's32[1]{0}', space=sflag, size = 0x4, scoped, tag = 'scoped memory for tpu_custom_call.1']
    #allocation5 [shape = 'u8[8192]{0}', space=vmem, size = 0x2000, scoped, tag = 'output window, operand 0, single buffered']
    %11 = vsyncpa [#allocation3], 0
    %12 = vsyncpa [#allocation4], 0
    // Predicated region
    $region2: #{tpu_custom_call.1} parent=1 // pred_check
      _
    $region3: #{tpu_custom_call.1} parent=1 // pred_check_branch
      %14 = sbr.rel (0) target = $region5
    $region4: #{tpu_custom_call.1} parent=1 // pred_region
      %s16 = ssub.s32 256, 256
      %17 = vsyncadd [#allocation3], %s16
      %s18 = sshll.u32 [#allocation2], 4
      %s19 = int_to_ptr.vmem [resolvable:$true] %s18
      %24 = dma.hbm_to_vmem [thread:$0]  %s0, 256, %s19, [#allocation3], 128, 128, 8
    $region5: #{tpu_custom_call.1} parent=1 // pred_fallthru
      _
    // Predicated region
    $region6: #{tpu_custom_call.1} parent=1 // pred_check
      _
    $region7: #{tpu_custom_call.1} parent=1 // pred_check_branch
      %26 = sbr.rel (0) target = $region9
    $region8: #{tpu_custom_call.1} parent=1 // pred_region
      _
    $region9: #{tpu_custom_call.1} parent=1 // pred_fallthru
      _
    // Predicated region
    $region10: #{tpu_custom_call.1} parent=1 // pred_check
      _
    $region11: #{tpu_custom_call.1} parent=1 // pred_check_branch
      %28 = sbr.rel (0) target = $region13
    $region12: #{tpu_custom_call.1} parent=1 // pred_region
      _
    $region13: #{tpu_custom_call.1} parent=1 // pred_fallthru
      _
    // Predicated region
    $region14: #{tpu_custom_call.1} parent=1 // pred_check
      _
    $region15: #{tpu_custom_call.1} parent=1 // pred_check_branch
      %30 = sbr.rel (0) target = $region17
    $region16: #{tpu_custom_call.1} parent=1 // pred_region
      %31 = dma.done [#allocation3], 256
    $region17: #{tpu_custom_call.1} parent=1 // pred_fallthru
      _
    %v32 = vld [vmem:[#allocation2] sm:$0xff]
    %v33 = vld [vmem:[#allocation2 + $0x8] sm:$0xff]
    %v36 = vcombine.high %v32, %v32
    %v37 = vcombine.high %v33, %v33
    %vm40 = vcmask 1043456
    %v41 = vsel %vm40, %v32, 0.0
    %v42 = vsel %vm40, %v36, 0.0
    %v43 = vadd.f32 %v41, %v42
    %44 = vadd.xlane.f32.xlu0 %v43
    %v45 = vpop.xlane.xlu0 %44
    %v46 = vsel %vm40, %v33, 0.0
    %v47 = vsel %vm40, %v37, 0.0
    %v48 = vadd.f32 %v46, %v47
    %49 = vadd.xlane.f32.xlu0 %v48
    %v50 = vpop.xlane.xlu0 %49
    %v51 = vsel %vm40, %v45, 0.0
    %v52 = vsel %vm40, %v50, 0.0
    %v53 = vadd.f32 %v51, %v52
    %v54 = vmul.f32 %v32, %v32
    %v55 = vmul.f32 %v33, %v33
    %v58 = vcombine.high %v54, %v54
    %v59 = vcombine.high %v55, %v55
    %v62 = vsel %vm40, %v54, 0.0
    %v63 = vsel %vm40, %v58, 0.0
    %v64 = vadd.f32 %v62, %v63
    %65 = vadd.xlane.f32.xlu0 %v64
    %v66 = vpop.xlane.xlu0 %65
    %v67 = vsel %vm40, %v55, 0.0
    %v68 = vsel %vm40, %v59, 0.0
    %v69 = vadd.f32 %v67, %v68
    %70 = vadd.xlane.f32.xlu0 %v69
    %v71 = vpop.xlane.xlu0 %70
    %v72 = vsel %vm40, %v66, 0.0
    %v73 = vsel %vm40, %v71, 0.0
    %v74 = vadd.f32 %v72, %v73
    %v75 = vrcp.pop 512.0
    %v76 = vmul.f32 %v53, %v75
    %v77 = vmul.f32 %v74, %v75
    %v78 = vmul.f32 %v76, %v76
    %v79 = vsub.f32 %v77, %v78
    %v80 = vmax.f32 %v79, 0.0
    %v81 = vadd.f32 %v80, 1e-05
    %v82 = vrsqrt.pop %v81
    %v83 = vld [vmem:[%s1] sm:$0xf]
    %v84 = vmul.f32 %v83, %v82
    %v85 = vld [vmem:[%s2] sm:$0xf]
    %v86 = vmul.f32 %v76, %v84
    %v87 = vsub.f32 %v85, %v86
    %89 = vset.pattern.permute.xlu0 0
    %90 = vperm.xlu0 %89, %v84
    %v91 = vpop.permute.xlu0 %90
    %v93 = vunpack.c.l.s4 839922192
    %v94 = vunpack.c.0.s8 %v93
    %v95 = vlaneseq
    %v96 = vshrl.u32 %v95, 7
    %v97 = vsub.s32 %v94, %v96
    %v98 = vrot.slane %v91, %v97
    %v100 = vmul.f32 %v32, %v98
    %v101 = vmul.f32 %v33, %v98
    %103 = vset.pattern.permute.xlu0 0
    %104 = vperm.xlu0 %103, %v87
    %v105 = vpop.permute.xlu0 %104
    %v107 = vunpack.c.l.s4 839922192
    %v108 = vunpack.c.0.s8 %v107
    %v109 = vlaneseq
    %v110 = vshrl.u32 %v109, 7
    %v111 = vsub.s32 %v108, %v110
    %v112 = vrot.slane %v105, %v111
    %v114 = vadd.f32 %v100, %v112
    %v115 = vadd.f32 %v101, %v112
    %116 = vst [vmem:[#allocation5] sm:$0xff] %v114
    %117 = vst [vmem:[#allocation5 + $0x8] sm:$0xff] %v115
    %vm118 = vcmask 3072
    %119 = vst.msk [vmem:[%s4] sm:$0xf] %vm118, %v76
    %120 = vst.msk [vmem:[%s5] sm:$0xf] %vm118, %v80
    // Predicated region
    $region18: #{tpu_custom_call.1} parent=1 // pred_check
      _
    $region19: #{tpu_custom_call.1} parent=1 // pred_check_branch
      %122 = sbr.rel (0) target = $region21
    $region20: #{tpu_custom_call.1} parent=1 // pred_region
      %s124 = ssub.s32 256, 256
      %125 = vsyncadd [#allocation4], %s124
      %s126 = sshll.u32 [#allocation5], 4
      %s127 = int_to_ptr.vmem [resolvable:$true] %s126
      %132 = dma.vmem_to_hbm [thread:$0]  %s127, 256, %s3, [#allocation4], 128, 128, 8
    $region21: #{tpu_custom_call.1} parent=1 // pred_fallthru
      _
    // Predicated region
    $region22: #{tpu_custom_call.1} parent=1 // pred_check
      _
    $region23: #{tpu_custom_call.1} parent=1 // pred_check_branch
      %134 = sbr.rel (0) target = $region25
    $region24: #{tpu_custom_call.1} parent=1 // pred_region
      _
    $region25: #{tpu_custom_call.1} parent=1 // pred_fallthru
      _
    // Predicated region
    $region26: #{tpu_custom_call.1} parent=1 // pred_check
      _
    $region27: #{tpu_custom_call.1} parent=1 // pred_check_branch
      %136 = sbr.rel (0) target = $region29
    $region28: #{tpu_custom_call.1} parent=1 // pred_region
      _
    $region29: #{tpu_custom_call.1} parent=1 // pred_fallthru
      _
    // Predicated region
    $region30: #{tpu_custom_call.1} parent=1 // pred_check
      _
    $region31: #{tpu_custom_call.1} parent=1 // pred_check_branch
      %138 = sbr.rel (0) target = $region33
    $region32: #{tpu_custom_call.1} parent=1 // pred_region
      %139 = dma.done [#allocation4], 256
    $region33: #{tpu_custom_call.1} parent=1 // pred_fallthru
      _
    // Predicated region
    $region34: #{tpu_custom_call.1} parent=1 // pred_check
      _
    $region35: #{tpu_custom_call.1} parent=1 // pred_check_branch
      %141 = sbr.rel (0) target = $region37
    $region36: #{tpu_custom_call.1} parent=1 // pred_region
      _
    $region37: #{tpu_custom_call.1} parent=1 // pred_fallthru
      _
    // Predicated region
    $region38: #{tpu_custom_call.1} parent=1 // pred_check
      _
    $region39: #{tpu_custom_call.1} parent=1 // pred_check_branch
      %143 = sbr.rel (0) target = $region41
    $region40: #{tpu_custom_call.1} parent=1 // pred_region
      _
    $region41: #{tpu_custom_call.1} parent=1 // pred_fallthru
      _
    %144 = vsyncpa [#allocation3], 1
    %145 = vsyncpa [#allocation4], 1

</llo_original>
